<compile_context>
chip_gen: v7x
topology: tpu7x:2x2x1
jax: 0.10.0
libtpu: 0.0.40
codegen_flags: <defaults>
</compile_context>

<pallas_src>
import functools

import numpy as np
import jax
import jax.numpy as jnp
from jax import lax
from jax.experimental import pallas as pl
from jax.experimental.pallas import tpu as pltpu


def _round_up(a: int, m: int) -> int:
    return ((a + m - 1) // m) * m


def _embedding_onehot_kernel(idx_ref, tbl_ref, out_ref, *, precision):
    """Vectorized per-tile embedding gather via one-hot MXU matmul.

    idx_ref : (tb, 1) int32 combined (offset-adjusted) row indices  [VMEM block]
    tbl_ref : (V, D)  embedding table, single VMEM-resident copy
    out_ref : (tb, D) output block
    """
    tb = out_ref.shape[0]
    V = tbl_ref.shape[0]

    idx = idx_ref[...]                                       # (tb, 1) int32
    cols = lax.broadcasted_iota(jnp.int32, (tb, V), 1)       # (tb, V) column ids
    onehot = (cols == idx).astype(tbl_ref.dtype)             # (tb, V) 0/1 rows

    acc = jnp.dot(onehot, tbl_ref[...],
                  preferred_element_type=jnp.float32,
                  precision=precision)                       # (tb, D) f32
    out_ref[...] = acc.astype(out_ref.dtype)                 # one full-tile store


def features_embedding(x: jax.Array, table: jax.Array, offsets: jax.Array,
                       *, block_rows: int = 1024) -> jax.Array:
    """Pallas TPU forward of FeaturesEmbedding.

    out[b, f, :] = table[x[b, f] + offsets[f], :]

    Args:
      x:       (B, F) integer field indices.
      table:   (V, D) embedding table, V = sum(in_features).
      offsets: (F,)   per-field base offsets.
    Returns:
      (B, F, D) array with table.dtype.
    """
    B, F = x.shape
    V, D = table.shape

    n = B * F
    tb = min(block_rows, _round_up(n, 8))       # rows per grid step (multiple of 8)
    n_pad = _round_up(n, tb)

    # Offset add folded into the wrapper (tiny O(B*F) int32 op); clamp keeps
    # any out-of-range index from reading stale VMEM. Padded tail rows gather
    # row 0 and are sliced off below.
    idx = (x.astype(jnp.int32) + offsets.astype(jnp.int32)[None, :]).reshape(n)
    idx = jnp.clip(idx, 0, V - 1)
    idx = jnp.pad(idx, (0, n_pad - n))
    idx2d = idx.reshape(n_pad, 1)

    # f32 tables: HIGHEST keeps the one-hot matmul an exact row copy (the
    # multi-pass bf16 decomposition reconstructs f32 exactly against a 0/1
    # LHS). bf16 tables are exact with the default single MXU pass.
    precision = lax.Precision.HIGHEST if table.dtype == jnp.float32 else None

    itemsize = jnp.dtype(table.dtype).itemsize
    cost = pl.CostEstimate(
        flops=2 * n_pad * V * D,
        transcendentals=0,
        bytes_accessed=V * D * itemsize + n_pad * D * itemsize + n_pad * 4,
    )

    kernel = functools.partial(_embedding_onehot_kernel, precision=precision)

    out = pl.pallas_call(
        kernel,
        out_shape=jax.ShapeDtypeStruct((n_pad, D), table.dtype),
        grid_spec=pltpu.PrefetchScalarGridSpec(
            num_scalar_prefetch=0,
            grid=(n_pad // tb,),
            in_specs=[
                # Per-tile combined indices, pipelined alongside the output.
                pl.BlockSpec((tb, 1), lambda i: (i, 0)),
                # Whole table resident in VMEM: single copy, single HBM load,
                # reused by every grid step (no double-buffering).
                pl.BlockSpec(memory_space=pltpu.MemorySpace.VMEM),
            ],
            out_specs=pl.BlockSpec((tb, D), lambda i: (i, 0)),
        ),
        compiler_params=pltpu.CompilerParams(
            dimension_semantics=("parallel",),     # independent row tiles -> megacore-friendly
            vmem_limit_bytes=48 * 1024 * 1024,     # above v5e's 16 MiB scoped default; per-gen tunable
        ),
        cost_estimate=cost,
    )(idx2d, table)

    return out[:n].reshape(B, F, D)


def _reference(x, table, offsets):
    flat = (x.astype(jnp.int32) + offsets.astype(jnp.int32)[None, :]).reshape(-1)
    return table[flat].reshape(x.shape[0], x.shape[1], table.shape[1])


if __name__ == "__main__":
    key = jax.random.PRNGKey(0)

    in_features = [10, 20, 30]     # vocab size per categorical field
    out_features = 32              # embedding dim
    F = len(in_features)
    V = sum(in_features)
    offsets = jnp.asarray(
        np.array((0, *np.cumsum(in_features)[:-1]), dtype=np.int64), dtype=jnp.int32)

    k_tbl, k_x = jax.random.split(key)
    table_f32 = jax.random.normal(k_tbl, (V, out_features), dtype=jnp.float32)
    table_bf16 = table_f32.astype(jnp.bfloat16)

    ok = True
    for B, br in ((2, 1024), (100, 64)):        # single-tile and multi-tile grid paths
        cols = []
        for v in in_features:
            k_x, sub = jax.random.split(k_x)
            cols.append(jax.random.randint(sub, (B,), 0, v, dtype=jnp.int32))
        x = jnp.stack(cols, axis=1)                     # (B, F)

        # float32 table (PyTorch default)
        out = jax.block_until_ready(features_embedding(x, table_f32, offsets, block_rows=br))
        ref = _reference(x, table_f32, offsets)
        ok &= out.shape == (B, F, out_features) and out.dtype == table_f32.dtype
        ok &= bool(jnp.allclose(out, ref, rtol=1e-4, atol=1e-5))   # exact in practice

        # bf16 table: halves table DMA / residency; gather stays bit-exact
        out_b = jax.block_until_ready(features_embedding(x, table_bf16, offsets, block_rows=br))
        ref_b = _reference(x, table_bf16, offsets)
        ok &= out_b.shape == (B, F, out_features) and out_b.dtype == table_bf16.dtype
        ok &= bool(jnp.array_equal(out_b, ref_b))

    assert ok, "mismatch vs reference"
    print("KERNEL_OK")
</pallas_src>

<mosaic_0001>
module attributes {stable_mosaic.version = 11 : i64} {
  func.func @_embedding_onehot_kernel(%arg0: i32, %arg1: memref<8x1xi32, #tpu.memory_space<vmem>>, %arg2: memref<60x32xf32, #tpu.memory_space<vmem>>, %arg3: memref<8x32xf32, #tpu.memory_space<vmem>>) attributes {dimension_semantics = [#tpu.dimension_semantics<parallel>], iteration_bounds = array<i64: 1>, scalar_prefetch = 0 : i64, scratch_operands = 0 : i64, tpu.core_type = #tpu.core_type<tc>, window_params = [{transform_indices = @transform_0, window_bounds = array<i64: 8, 1>}, {pipeline_mode = #tpu.pipeline_mode<synchronous>, transform_indices = @transform_1, window_bounds = array<i64: 60, 32>}, {transform_indices = @transform_2, window_bounds = array<i64: 8, 32>}]} {
    %c0 = arith.constant 0 : index
    %c0_0 = arith.constant 0 : index
    %0 = vector.load %arg1[%c0, %c0_0] : memref<8x1xi32, #tpu.memory_space<vmem>>, vector<8x1xi32>
    %1 = tpu.iota {dimensions = array<i32: 1>} : vector<8x60xi32>
    %2 = vector.broadcast %0 : vector<8x1xi32> to vector<8x60xi32>
    %3 = arith.cmpi eq, %1, %2 : vector<8x60xi32>
    %4 = arith.extui %3 : vector<8x60xi1> to vector<8x60xi32>
    %5 = arith.sitofp %4 : vector<8x60xi32> to vector<8x60xf32>
    %c0_1 = arith.constant 0 : index
    %c0_2 = arith.constant 0 : index
    %6 = vector.load %arg2[%c0_1, %c0_2] : memref<60x32xf32, #tpu.memory_space<vmem>>, vector<60x32xf32>
    %cst = arith.constant dense<0.000000e+00> : vector<8x32xf32>
    %7 = tpu.matmul %5, %6, %cst {dimension_numbers = #tpu.dot_dimension_numbers<[1], [0], [0], [1], [0, 0, 1, 1], [], []>, precision = #tpu.contract_precision<fp32>} : vector<8x60xf32>, vector<60x32xf32>, vector<8x32xf32> -> vector<8x32xf32>
    %c0_3 = arith.constant 0 : index
    %c0_4 = arith.constant 0 : index
    %8 = vector.load %arg3[%c0_3, %c0_4] : memref<8x32xf32, #tpu.memory_space<vmem>>, vector<8x32xf32>
    tpu.vector_store %arg3[%c0_3, %c0_4], %7 {strides = array<i32>} : memref<8x32xf32, #tpu.memory_space<vmem>>, vector<8x32xf32>,
    return
  }
  func.func @transform_0(%arg0: i32) -> (i32, i32) {
    %c0_i32 = arith.constant 0 : i32
    %c0_i32_0 = arith.constant 0 : i32
    return %arg0, %c0_i32 : i32, i32
  }
  func.func @transform_1(%arg0: i32) -> (i32, i32) {
    %c0_i32 = arith.constant 0 : i32
    %c0_i32_0 = arith.constant 0 : i32
    %c0_i32_1 = arith.constant 0 : i32
    return %c0_i32, %c0_i32_0 : i32, i32
  }
  func.func @transform_2(%arg0: i32) -> (i32, i32) {
    %c0_i32 = arith.constant 0 : i32
    %c0_i32_0 = arith.constant 0 : i32
    return %arg0, %c0_i32 : i32, i32
  }
}

</mosaic_0001>

<llo_original>
// kernel: tpu_custom_call.1
$region0: #{tpu_custom_call.1}
  #allocation0 [shape = 'u32[]', space=smem, size = 0x4, offset = 0x4, fixed_abs, tag = 'smem constant byte address 0x4 - core index']
  #allocation1 [shape = 'u32[144,128]{1,0:T(1,128)}', space=vmem, size = 0x12000, scoped, tag = 'internal scratch']
  %s0 = inlined_call_operand.vmem [shape: s32[8,1], index: 0, kind: input, shape index: {}]
  %s1 = inlined_call_operand.vmem [shape: f32[60,32], index: 1, kind: input, shape index: {}]
  %s2 = inlined_call_operand.hbm [shape: f32[8,32], index: 2, kind: output, shape index: {}]
  %s3 = sld [smem:[#allocation0]]
  $region18: #{tpu_custom_call.1} parent=0
    _
  %s5 = ssub.s32 1, %s3
  %s6 = scalar_select 0, %s5, %s3
  $region1: #{tpu_custom_call.1} parent=0
    #allocation2 [shape = 'u8[4096]{0}', space=vmem, size = 0x1000, scoped, tag = 'output window, operand 0, single buffered']
    #allocation3 [shape = 's32[1]{0}', space=sflag, size = 0x4, scoped, tag = 'scoped memory for tpu_custom_call.1']
    %7 = vsyncpa [#allocation3], 0
    // Predicated region
    $region2: #{tpu_custom_call.1} parent=1 // pred_check
      _
    $region3: #{tpu_custom_call.1} parent=1 // pred_check_branch
      %9 = sbr.rel (0) target = $region5
    $region4: #{tpu_custom_call.1} parent=1 // pred_region
      _
    $region5: #{tpu_custom_call.1} parent=1 // pred_fallthru
      _
    // Predicated region
    $region6: #{tpu_custom_call.1} parent=1 // pred_check
      _
    $region7: #{tpu_custom_call.1} parent=1 // pred_check_branch
      %11 = sbr.rel (0) target = $region9
    $region8: #{tpu_custom_call.1} parent=1 // pred_region
      _
    $region9: #{tpu_custom_call.1} parent=1 // pred_fallthru
      _
    %v12 = vld [vmem:[%s0] sm:$0xff]
    %v13 = vlaneseq
    %v14 = vand.u32 %v13, 127
    %15 = vset.pattern.permute.xlu0 0
    %16 = vperm.xlu0 %15, %v12
    %v17 = vpop.permute.xlu0 %16
    %vm18 = vcmp.eq.s32.totalorder %v14, %v17
    %v19 = vsel %vm18, 1, 0
    %v20 = vcvt.s32.f32 %v19
    %v21 = vld [vmem:[%s1] sm:$0xff]
    %v22 = vld [vmem:[%s1 + $0x8] sm:$0xff]
    %v23 = vld [vmem:[%s1 + $0x10] sm:$0xff]
    %v24 = vld [vmem:[%s1 + $0x18] sm:$0xff]
    %v25 = vld [vmem:[%s1 + $0x20] sm:$0xff]
    %v26 = vld [vmem:[%s1 + $0x28] sm:$0xff]
    %v27 = vld [vmem:[%s1 + $0x30] sm:$0xff]
    %v28 = vld [vmem:[%s1 + $0x38] sm:$0xf]
    %vm29 = vcmask 490496
    %v31 = vsel %vm29, %v20, 0
    %vm33 = vcmask 1043456
    %v35 = vsel %vm33, %v28, 0
    %37 = vmatprep.subr.mxu0 0.0
    %v38 = vand.u32 %v21, 4294901760
    %39 = vmatpush1.msra.mxu0 %v38
    %40 = vmatprep.subr.mxu0 0.0
    %v41 = vand.u32 %v22, 4294901760
    %42 = vmatpush1.msra.mxu0 %v41
    %43 = vmatprep.subr.mxu0 0.0
    %v44 = vand.u32 %v23, 4294901760
    %45 = vmatpush1.msra.mxu0 %v44
    %46 = vmatprep.subr.mxu0 0.0
    %v47 = vand.u32 %v24, 4294901760
    %48 = vmatpush1.msra.mxu0 %v47
    %49 = vmatprep.subr.mxu0 0.0
    %v50 = vand.u32 %v25, 4294901760
    %51 = vmatpush1.msra.mxu0 %v50
    %52 = vmatprep.subr.mxu0 0.0
    %v53 = vand.u32 %v26, 4294901760
    %54 = vmatpush1.msra.mxu0 %v53
    %55 = vmatprep.subr.mxu0 0.0
    %v56 = vand.u32 %v27, 4294901760
    %57 = vmatpush1.msra.mxu0 %v56
    %58 = vmatprep.subr.mxu0 0.0
    %v59 = vand.u32 %v35, 4294901760
    %60 = vmatpush1.msra.mxu0 %v59
    %61 = vmatprep.subr.mxu0 0.0
    %62 = vmatpush1.msra.mxu0 0.0
    %63 = vmatprep.subr.mxu0 0.0
    %64 = vmatpush1.msra.mxu0 0.0
    %65 = vmatprep.subr.mxu0 0.0
    %66 = vmatpush1.msra.mxu0 0.0
    %67 = vmatprep.subr.mxu0 0.0
    %68 = vmatpush1.msra.mxu0 0.0
    %69 = vmatprep.subr.mxu0 0.0
    %70 = vmatpush1.msra.mxu0 0.0
    %71 = vmatprep.subr.mxu0 0.0
    %72 = vmatpush1.msra.mxu0 0.0
    %73 = vmatprep.subr.mxu0 0.0
    %74 = vmatpush1.msra.mxu0 0.0
    %75 = vmatprep.subr.mxu0 0.0
    %76 = vmatpush1.msra.mxu0 0.0
    %77 = vmatprep.subr.mxu0 0.0
    %78 = vmatpush1.msra.mxu0 0.0
    %79 = vmatprep.subr.mxu0 0.0
    %80 = vmatpush1.msra.mxu0 0.0
    %81 = vmatprep.subr.mxu0 0.0
    %82 = vmatpush1.msra.mxu0 0.0
    %83 = vmatprep.subr.mxu0 0.0
    %84 = vmatpush1.msra.mxu0 0.0
    %85 = vmatprep.subr.mxu0 0.0
    %86 = vmatpush1.msra.mxu0 0.0
    %87 = vmatprep.subr.mxu0 0.0
    %88 = vmatpush1.msra.mxu0 0.0
    %89 = vmatprep.subr.mxu0 0.0
    %90 = vmatpush1.msra.mxu0 0.0
    %91 = vmatprep.subr.mxu0 0.0
    %92 = vmatpush1.msra.mxu0 0.0
    %93 = vmatprep.subr.mxu0 0.0
    %94 = vmatpush1.msra.mxu0 0.0
    %95 = vmatprep.subr.mxu0 0.0
    %96 = vmatpush1.msra.mxu0 0.0
    %97 = vmatprep.subr.mxu0 0.0
    %98 = vmatpush1.msra.mxu0 0.0
    %99 = vmatprep.subr.mxu0 0.0
    %100 = vmatpush1.msra.mxu0 0.0
    %101 = vmatprep.subr.mxu0 0.0
    %102 = vmatpush1.msra.mxu0 0.0
    %103 = vmatprep.subr.mxu0 0.0
    %104 = vmatpush1.msra.mxu0 0.0
    %105 = vmatprep.subr.mxu0 0.0
    %106 = vmatpush1.msra.mxu0 0.0
    %107 = vmatprep.subr.mxu0 0.0
    %108 = vmatpush1.msra.mxu0 0.0
    %109 = vmatprep.mubr.f32.mxu0 0.0
    %v110 = vand.u32 %v31, 4294901760
    %v111 = vsub.f32 %v31, %v110
    %v112 = vand.u32 %v111, 4294901760
    %v113 = vsub.f32 %v111, %v112
    %v114 = vand.u32 %v113, 4294901760
    %115 = vmatmul.mubr.f32.gmra.mrb[0].mxu0 %v114
    %v116 = vpop.f32.mrb[0].mxu0
    %v117 = vadd.f32 0.0, %v116
    %v118 = vpop.f32.mrb[0].mxu0
    %119 = vdwg.mxu0
    %120 = vmatprep.subr.mxu0 0.0
    %v121 = vand.u32 %v21, 4294901760
    %v122 = vsub.f32 %v21, %v121
    %v123 = vand.u32 %v122, 4294901760
    %v124 = vsub.f32 %v122, %v123
    %v125 = vand.u32 %v124, 4294901760
    %126 = vmatpush1.msra.mxu0 %v125
    %127 = vmatprep.subr.mxu0 0.0
    %v128 = vand.u32 %v22, 4294901760
    %v129 = vsub.f32 %v22, %v128
    %v130 = vand.u32 %v129, 4294901760
    %v131 = vsub.f32 %v129, %v130
    %v132 = vand.u32 %v131, 4294901760
    %133 = vmatpush1.msra.mxu0 %v132
    %134 = vmatprep.subr.mxu0 0.0
    %v135 = vand.u32 %v23, 4294901760
    %v136 = vsub.f32 %v23, %v135
    %v137 = vand.u32 %v136, 4294901760
    %v138 = vsub.f32 %v136, %v137
    %v139 = vand.u32 %v138, 4294901760
    %140 = vmatpush1.msra.mxu0 %v139
    %141 = vmatprep.subr.mxu0 0.0
    %v142 = vand.u32 %v24, 4294901760
    %v143 = vsub.f32 %v24, %v142
    %v144 = vand.u32 %v143, 4294901760
    %v145 = vsub.f32 %v143, %v144
    %v146 = vand.u32 %v145, 4294901760
    %147 = vmatpush1.msra.mxu0 %v146
    %148 = vmatprep.subr.mxu0 0.0
    %v149 = vand.u32 %v25, 4294901760
    %v150 = vsub.f32 %v25, %v149
    %v151 = vand.u32 %v150, 4294901760
    %v152 = vsub.f32 %v150, %v151
    %v153 = vand.u32 %v152, 4294901760
    %154 = vmatpush1.msra.mxu0 %v153
    %155 = vmatprep.subr.mxu0 0.0
    %v156 = vand.u32 %v26, 4294901760
    %v157 = vsub.f32 %v26, %v156
    %v158 = vand.u32 %v157, 4294901760
    %v159 = vsub.f32 %v157, %v158
    %v160 = vand.u32 %v159, 4294901760
    %161 = vmatpush1.msra.mxu0 %v160
    %162 = vmatprep.subr.mxu0 0.0
    %v163 = vand.u32 %v27, 4294901760
    %v164 = vsub.f32 %v27, %v163
    %v165 = vand.u32 %v164, 4294901760
    %v166 = vsub.f32 %v164, %v165
    %v167 = vand.u32 %v166, 4294901760
    %168 = vmatpush1.msra.mxu0 %v167
    %169 = vmatprep.subr.mxu0 0.0
    %v170 = vand.u32 %v35, 4294901760
    %v171 = vsub.f32 %v35, %v170
    %v172 = vand.u32 %v171, 4294901760
    %v173 = vsub.f32 %v171, %v172
    %v174 = vand.u32 %v173, 4294901760
    %175 = vmatpush1.msra.mxu0 %v174
    %176 = vmatprep.subr.mxu0 0.0
    %177 = vmatpush1.msra.mxu0 0.0
    %178 = vmatprep.subr.mxu0 0.0
    %179 = vmatpush1.msra.mxu0 0.0
    %180 = vmatprep.subr.mxu0 0.0
    %181 = vmatpush1.msra.mxu0 0.0
    %182 = vmatprep.subr.mxu0 0.0
    %183 = vmatpush1.msra.mxu0 0.0
    %184 = vmatprep.subr.mxu0 0.0
    %185 = vmatpush1.msra.mxu0 0.0
    %186 = vmatprep.subr.mxu0 0.0
    %187 = vmatpush1.msra.mxu0 0.0
    %188 = vmatprep.subr.mxu0 0.0
    %189 = vmatpush1.msra.mxu0 0.0
    %190 = vmatprep.subr.mxu0 0.0
    %191 = vmatpush1.msra.mxu0 0.0
    %192 = vmatprep.subr.mxu0 0.0
    %193 = vmatpush1.msra.mxu0 0.0
    %194 = vmatprep.subr.mxu0 0.0
    %195 = vmatpush1.msra.mxu0 0.0
    %196 = vmatprep.subr.mxu0 0.0
    %197 = vmatpush1.msra.mxu0 0.0
    %198 = vmatprep.subr.mxu0 0.0
    %199 = vmatpush1.msra.mxu0 0.0
    %200 = vmatprep.subr.mxu0 0.0
    %201 = vmatpush1.msra.mxu0 0.0
    %202 = vmatprep.subr.mxu0 0.0
    %203 = vmatpush1.msra.mxu0 0.0
    %204 = vmatprep.subr.mxu0 0.0
    %205 = vmatpush1.msra.mxu0 0.0
    %206 = vmatprep.subr.mxu0 0.0
    %207 = vmatpush1.msra.mxu0 0.0
    %208 = vmatprep.subr.mxu0 0.0
    %209 = vmatpush1.msra.mxu0 0.0
    %210 = vmatprep.subr.mxu0 0.0
    %211 = vmatpush1.msra.mxu0 0.0
    %212 = vmatprep.subr.mxu0 0.0
    %213 = vmatpush1.msra.mxu0 0.0
    %214 = vmatprep.subr.mxu0 0.0
    %215 = vmatpush1.msra.mxu0 0.0
    %216 = vmatprep.subr.mxu0 0.0
    %217 = vmatpush1.msra.mxu0 0.0
    %218 = vmatprep.subr.mxu0 0.0
    %219 = vmatpush1.msra.mxu0 0.0
    %220 = vmatprep.subr.mxu0 0.0
    %221 = vmatpush1.msra.mxu0 0.0
    %222 = vmatprep.subr.mxu0 0.0
    %223 = vmatpush1.msra.mxu0 0.0
    %224 = vmatprep.mubr.f32.mxu0 0.0
    %v225 = vand.u32 %v31, 4294901760
    %226 = vmatmul.mubr.f32.gmra.mrb[0].mxu0 %v225
    %v227 = vpop.f32.mrb[0].mxu0
    %v228 = vadd.f32 %v117, %v227
    %v229 = vpop.f32.mrb[0].mxu0
    %230 = vdwg.mxu0
    %231 = vmatprep.subr.mxu0 0.0
    %v232 = vand.u32 %v21, 4294901760
    %v233 = vsub.f32 %v21, %v232
    %234 = vmatpush1.msra.mxu0 %v233
    %235 = vmatprep.subr.mxu0 0.0
    %v236 = vand.u32 %v22, 4294901760
    %v237 = vsub.f32 %v22, %v236
    %238 = vmatpush1.msra.mxu0 %v237
    %239 = vmatprep.subr.mxu0 0.0
    %v240 = vand.u32 %v23, 4294901760
    %v241 = vsub.f32 %v23, %v240
    %242 = vmatpush1.msra.mxu0 %v241
    %243 = vmatprep.subr.mxu0 0.0
    %v244 = vand.u32 %v24, 4294901760
    %v245 = vsub.f32 %v24, %v244
    %246 = vmatpush1.msra.mxu0 %v245
    %247 = vmatprep.subr.mxu0 0.0
    %v248 = vand.u32 %v25, 4294901760
    %v249 = vsub.f32 %v25, %v248
    %250 = vmatpush1.msra.mxu0 %v249
    %251 = vmatprep.subr.mxu0 0.0
    %v252 = vand.u32 %v26, 4294901760
    %v253 = vsub.f32 %v26, %v252
    %254 = vmatpush1.msra.mxu0 %v253
    %255 = vmatprep.subr.mxu0 0.0
    %v256 = vand.u32 %v27, 4294901760
    %v257 = vsub.f32 %v27, %v256
    %258 = vmatpush1.msra.mxu0 %v257
    %259 = vmatprep.subr.mxu0 0.0
    %v260 = vand.u32 %v35, 4294901760
    %v261 = vsub.f32 %v35, %v260
    %262 = vmatpush1.msra.mxu0 %v261
    %263 = vmatprep.subr.mxu0 0.0
    %264 = vmatpush1.msra.mxu0 0.0
    %265 = vmatprep.subr.mxu0 0.0
    %266 = vmatpush1.msra.mxu0 0.0
    %267 = vmatprep.subr.mxu0 0.0
    %268 = vmatpush1.msra.mxu0 0.0
    %269 = vmatprep.subr.mxu0 0.0
    %270 = vmatpush1.msra.mxu0 0.0
    %271 = vmatprep.subr.mxu0 0.0
    %272 = vmatpush1.msra.mxu0 0.0
    %273 = vmatprep.subr.mxu0 0.0
    %274 = vmatpush1.msra.mxu0 0.0
    %275 = vmatprep.subr.mxu0 0.0
    %276 = vmatpush1.msra.mxu0 0.0
    %277 = vmatprep.subr.mxu0 0.0
    %278 = vmatpush1.msra.mxu0 0.0
    %279 = vmatprep.subr.mxu0 0.0
    %280 = vmatpush1.msra.mxu0 0.0
    %281 = vmatprep.subr.mxu0 0.0
    %282 = vmatpush1.msra.mxu0 0.0
    %283 = vmatprep.subr.mxu0 0.0
    %284 = vmatpush1.msra.mxu0 0.0
    %285 = vmatprep.subr.mxu0 0.0
    %286 = vmatpush1.msra.mxu0 0.0
    %287 = vmatprep.subr.mxu0 0.0
    %288 = vmatpush1.msra.mxu0 0.0
    %289 = vmatprep.subr.mxu0 0.0
    %290 = vmatpush1.msra.mxu0 0.0
    %291 = vmatprep.subr.mxu0 0.0
    %292 = vmatpush1.msra.mxu0 0.0
    %293 = vmatprep.subr.mxu0 0.0
    %294 = vmatpush1.msra.mxu0 0.0
    %295 = vmatprep.subr.mxu0 0.0
    %296 = vmatpush1.msra.mxu0 0.0
    %297 = vmatprep.subr.mxu0 0.0
    %298 = vmatpush1.msra.mxu0 0.0
    %299 = vmatprep.subr.mxu0 0.0
    %300 = vmatpush1.msra.mxu0 0.0
    %301 = vmatprep.subr.mxu0 0.0
    %302 = vmatpush1.msra.mxu0 0.0
    %303 = vmatprep.subr.mxu0 0.0
    %304 = vmatpush1.msra.mxu0 0.0
    %305 = vmatprep.subr.mxu0 0.0
    %306 = vmatpush1.msra.mxu0 0.0
    %307 = vmatprep.subr.mxu0 0.0
    %308 = vmatpush1.msra.mxu0 0.0
    %309 = vmatprep.subr.mxu0 0.0
    %310 = vmatpush1.msra.mxu0 0.0
    %311 = vmatprep.mubr.f32.mxu0 0.0
    %v312 = vand.u32 %v31, 4294901760
    %v313 = vsub.f32 %v31, %v312
    %314 = vmatmul.mubr.f32.gmra.mrb[0].mxu0 %v313
    %v315 = vpop.f32.mrb[0].mxu0
    %v316 = vadd.f32 %v228, %v315
    %v317 = vpop.f32.mrb[0].mxu0
    %318 = vdwg.mxu0
    %319 = vmatprep.subr.mxu0 0.0
    %v320 = vand.u32 %v21, 4294901760
    %321 = vmatpush1.msra.mxu0 %v320
    %322 = vmatprep.subr.mxu0 0.0
    %v323 = vand.u32 %v22, 4294901760
    %324 = vmatpush1.msra.mxu0 %v323
    %325 = vmatprep.subr.mxu0 0.0
    %v326 = vand.u32 %v23, 4294901760
    %327 = vmatpush1.msra.mxu0 %v326
    %328 = vmatprep.subr.mxu0 0.0
    %v329 = vand.u32 %v24, 4294901760
    %330 = vmatpush1.msra.mxu0 %v329
    %331 = vmatprep.subr.mxu0 0.0
    %v332 = vand.u32 %v25, 4294901760
    %333 = vmatpush1.msra.mxu0 %v332
    %334 = vmatprep.subr.mxu0 0.0
    %v335 = vand.u32 %v26, 4294901760
    %336 = vmatpush1.msra.mxu0 %v335
    %337 = vmatprep.subr.mxu0 0.0
    %v338 = vand.u32 %v27, 4294901760
    %339 = vmatpush1.msra.mxu0 %v338
    %340 = vmatprep.subr.mxu0 0.0
    %v341 = vand.u32 %v35, 4294901760
    %342 = vmatpush1.msra.mxu0 %v341
    %343 = vmatprep.subr.mxu0 0.0
    %344 = vmatpush1.msra.mxu0 0.0
    %345 = vmatprep.subr.mxu0 0.0
    %346 = vmatpush1.msra.mxu0 0.0
    %347 = vmatprep.subr.mxu0 0.0
    %348 = vmatpush1.msra.mxu0 0.0
    %349 = vmatprep.subr.mxu0 0.0
    %350 = vmatpush1.msra.mxu0 0.0
    %351 = vmatprep.subr.mxu0 0.0
    %352 = vmatpush1.msra.mxu0 0.0
    %353 = vmatprep.subr.mxu0 0.0
    %354 = vmatpush1.msra.mxu0 0.0
    %355 = vmatprep.subr.mxu0 0.0
    %356 = vmatpush1.msra.mxu0 0.0
    %357 = vmatprep.subr.mxu0 0.0
    %358 = vmatpush1.msra.mxu0 0.0
    %359 = vmatprep.subr.mxu0 0.0
    %360 = vmatpush1.msra.mxu0 0.0
    %361 = vmatprep.subr.mxu0 0.0
    %362 = vmatpush1.msra.mxu0 0.0
    %363 = vmatprep.subr.mxu0 0.0
    %364 = vmatpush1.msra.mxu0 0.0
    %365 = vmatprep.subr.mxu0 0.0
    %366 = vmatpush1.msra.mxu0 0.0
    %367 = vmatprep.subr.mxu0 0.0
    %368 = vmatpush1.msra.mxu0 0.0
    %369 = vmatprep.subr.mxu0 0.0
    %370 = vmatpush1.msra.mxu0 0.0
    %371 = vmatprep.subr.mxu0 0.0
    %372 = vmatpush1.msra.mxu0 0.0
    %373 = vmatprep.subr.mxu0 0.0
    %374 = vmatpush1.msra.mxu0 0.0
    %375 = vmatprep.subr.mxu0 0.0
    %376 = vmatpush1.msra.mxu0 0.0
    %377 = vmatprep.subr.mxu0 0.0
    %378 = vmatpush1.msra.mxu0 0.0
    %379 = vmatprep.subr.mxu0 0.0
    %380 = vmatpush1.msra.mxu0 0.0
    %381 = vmatprep.subr.mxu0 0.0
    %382 = vmatpush1.msra.mxu0 0.0
    %383 = vmatprep.subr.mxu0 0.0
    %384 = vmatpush1.msra.mxu0 0.0
    %385 = vmatprep.subr.mxu0 0.0
    %386 = vmatpush1.msra.mxu0 0.0
    %387 = vmatprep.subr.mxu0 0.0
    %388 = vmatpush1.msra.mxu0 0.0
    %389 = vmatprep.subr.mxu0 0.0
    %390 = vmatpush1.msra.mxu0 0.0
    %391 = vmatprep.mubr.f32.mxu0 0.0
    %v392 = vand.u32 %v31, 4294901760
    %v393 = vsub.f32 %v31, %v392
    %v394 = vand.u32 %v393, 4294901760
    %395 = vmatmul.mubr.f32.gmra.mrb[0].mxu0 %v394
    %v396 = vpop.f32.mrb[0].mxu0
    %v397 = vadd.f32 %v316, %v396
    %v398 = vpop.f32.mrb[0].mxu0
    %399 = vdwg.mxu0
    %400 = vmatprep.subr.mxu0 0.0
    %v401 = vand.u32 %v21, 4294901760
    %v402 = vsub.f32 %v21, %v401
    %v403 = vand.u32 %v402, 4294901760
    %404 = vmatpush1.msra.mxu0 %v403
    %405 = vmatprep.subr.mxu0 0.0
    %v406 = vand.u32 %v22, 4294901760
    %v407 = vsub.f32 %v22, %v406
    %v408 = vand.u32 %v407, 4294901760
    %409 = vmatpush1.msra.mxu0 %v408
    %410 = vmatprep.subr.mxu0 0.0
    %v411 = vand.u32 %v23, 4294901760
    %v412 = vsub.f32 %v23, %v411
    %v413 = vand.u32 %v412, 4294901760
    %414 = vmatpush1.msra.mxu0 %v413
    %415 = vmatprep.subr.mxu0 0.0
    %v416 = vand.u32 %v24, 4294901760
    %v417 = vsub.f32 %v24, %v416
    %v418 = vand.u32 %v417, 4294901760
    %419 = vmatpush1.msra.mxu0 %v418
    %420 = vmatprep.subr.mxu0 0.0
    %v421 = vand.u32 %v25, 4294901760
    %v422 = vsub.f32 %v25, %v421
    %v423 = vand.u32 %v422, 4294901760
    %424 = vmatpush1.msra.mxu0 %v423
    %425 = vmatprep.subr.mxu0 0.0
    %v426 = vand.u32 %v26, 4294901760
    %v427 = vsub.f32 %v26, %v426
    %v428 = vand.u32 %v427, 4294901760
    %429 = vmatpush1.msra.mxu0 %v428
    %430 = vmatprep.subr.mxu0 0.0
    %v431 = vand.u32 %v27, 4294901760
    %v432 = vsub.f32 %v27, %v431
    %v433 = vand.u32 %v432, 4294901760
    %434 = vmatpush1.msra.mxu0 %v433
    %435 = vmatprep.subr.mxu0 0.0
    %v436 = vand.u32 %v35, 4294901760
    %v437 = vsub.f32 %v35, %v436
    %v438 = vand.u32 %v437, 4294901760
    %439 = vmatpush1.msra.mxu0 %v438
    %440 = vmatprep.subr.mxu0 0.0
    %441 = vmatpush1.msra.mxu0 0.0
    %442 = vmatprep.subr.mxu0 0.0
    %443 = vmatpush1.msra.mxu0 0.0
    %444 = vmatprep.subr.mxu0 0.0
    %445 = vmatpush1.msra.mxu0 0.0
    %446 = vmatprep.subr.mxu0 0.0
    %447 = vmatpush1.msra.mxu0 0.0
    %448 = vmatprep.subr.mxu0 0.0
    %449 = vmatpush1.msra.mxu0 0.0
    %450 = vmatprep.subr.mxu0 0.0
    %451 = vmatpush1.msra.mxu0 0.0
    %452 = vmatprep.subr.mxu0 0.0
    %453 = vmatpush1.msra.mxu0 0.0
    %454 = vmatprep.subr.mxu0 0.0
    %455 = vmatpush1.msra.mxu0 0.0
    %456 = vmatprep.subr.mxu0 0.0
    %457 = vmatpush1.msra.mxu0 0.0
    %458 = vmatprep.subr.mxu0 0.0
    %459 = vmatpush1.msra.mxu0 0.0
    %460 = vmatprep.subr.mxu0 0.0
    %461 = vmatpush1.msra.mxu0 0.0
    %462 = vmatprep.subr.mxu0 0.0
    %463 = vmatpush1.msra.mxu0 0.0
    %464 = vmatprep.subr.mxu0 0.0
    %465 = vmatpush1.msra.mxu0 0.0
    %466 = vmatprep.subr.mxu0 0.0
    %467 = vmatpush1.msra.mxu0 0.0
    %468 = vmatprep.subr.mxu0 0.0
    %469 = vmatpush1.msra.mxu0 0.0
    %470 = vmatprep.subr.mxu0 0.0
    %471 = vmatpush1.msra.mxu0 0.0
    %472 = vmatprep.subr.mxu0 0.0
    %473 = vmatpush1.msra.mxu0 0.0
    %474 = vmatprep.subr.mxu0 0.0
    %475 = vmatpush1.msra.mxu0 0.0
    %476 = vmatprep.subr.mxu0 0.0
    %477 = vmatpush1.msra.mxu0 0.0
    %478 = vmatprep.subr.mxu0 0.0
    %479 = vmatpush1.msra.mxu0 0.0
    %480 = vmatprep.subr.mxu0 0.0
    %481 = vmatpush1.msra.mxu0 0.0
    %482 = vmatprep.subr.mxu0 0.0
    %483 = vmatpush1.msra.mxu0 0.0
    %484 = vmatprep.subr.mxu0 0.0
    %485 = vmatpush1.msra.mxu0 0.0
    %486 = vmatprep.subr.mxu0 0.0
    %487 = vmatpush1.msra.mxu0 0.0
    %488 = vmatprep.mubr.f32.mxu0 0.0
    %v489 = vand.u32 %v31, 4294901760
    %490 = vmatmul.mubr.f32.gmra.mrb[0].mxu0 %v489
    %v491 = vpop.f32.mrb[0].mxu0
    %v492 = vadd.f32 %v397, %v491
    %v493 = vpop.f32.mrb[0].mxu0
    %494 = vdwg.mxu0
    %495 = vmatprep.subr.mxu0 0.0
    %v496 = vand.u32 %v21, 4294901760
    %497 = vmatpush1.msra.mxu0 %v496
    %498 = vmatprep.subr.mxu0 0.0
    %v499 = vand.u32 %v22, 4294901760
    %500 = vmatpush1.msra.mxu0 %v499
    %501 = vmatprep.subr.mxu0 0.0
    %v502 = vand.u32 %v23, 4294901760
    %503 = vmatpush1.msra.mxu0 %v502
    %504 = vmatprep.subr.mxu0 0.0
    %v505 = vand.u32 %v24, 4294901760
    %506 = vmatpush1.msra.mxu0 %v505
    %507 = vmatprep.subr.mxu0 0.0
    %v508 = vand.u32 %v25, 4294901760
    %509 = vmatpush1.msra.mxu0 %v508
    %510 = vmatprep.subr.mxu0 0.0
    %v511 = vand.u32 %v26, 4294901760
    %512 = vmatpush1.msra.mxu0 %v511
    %513 = vmatprep.subr.mxu0 0.0
    %v514 = vand.u32 %v27, 4294901760
    %515 = vmatpush1.msra.mxu0 %v514
    %516 = vmatprep.subr.mxu0 0.0
    %v517 = vand.u32 %v35, 4294901760
    %518 = vmatpush1.msra.mxu0 %v517
    %519 = vmatprep.subr.mxu0 0.0
    %520 = vmatpush1.msra.mxu0 0.0
    %521 = vmatprep.subr.mxu0 0.0
    %522 = vmatpush1.msra.mxu0 0.0
    %523 = vmatprep.subr.mxu0 0.0
    %524 = vmatpush1.msra.mxu0 0.0
    %525 = vmatprep.subr.mxu0 0.0
    %526 = vmatpush1.msra.mxu0 0.0
    %527 = vmatprep.subr.mxu0 0.0
    %528 = vmatpush1.msra.mxu0 0.0
    %529 = vmatprep.subr.mxu0 0.0
    %530 = vmatpush1.msra.mxu0 0.0
    %531 = vmatprep.subr.mxu0 0.0
    %532 = vmatpush1.msra.mxu0 0.0
    %533 = vmatprep.subr.mxu0 0.0
    %534 = vmatpush1.msra.mxu0 0.0
    %535 = vmatprep.subr.mxu0 0.0
    %536 = vmatpush1.msra.mxu0 0.0
    %537 = vmatprep.subr.mxu0 0.0
    %538 = vmatpush1.msra.mxu0 0.0
    %539 = vmatprep.subr.mxu0 0.0
    %540 = vmatpush1.msra.mxu0 0.0
    %541 = vmatprep.subr.mxu0 0.0
    %542 = vmatpush1.msra.mxu0 0.0
    %543 = vmatprep.subr.mxu0 0.0
    %544 = vmatpush1.msra.mxu0 0.0
    %545 = vmatprep.subr.mxu0 0.0
    %546 = vmatpush1.msra.mxu0 0.0
    %547 = vmatprep.subr.mxu0 0.0
    %548 = vmatpush1.msra.mxu0 0.0
    %549 = vmatprep.subr.mxu0 0.0
    %550 = vmatpush1.msra.mxu0 0.0
    %551 = vmatprep.subr.mxu0 0.0
    %552 = vmatpush1.msra.mxu0 0.0
    %553 = vmatprep.subr.mxu0 0.0
    %554 = vmatpush1.msra.mxu0 0.0
    %555 = vmatprep.subr.mxu0 0.0
    %556 = vmatpush1.msra.mxu0 0.0
    %557 = vmatprep.subr.mxu0 0.0
    %558 = vmatpush1.msra.mxu0 0.0
    %559 = vmatprep.subr.mxu0 0.0
    %560 = vmatpush1.msra.mxu0 0.0
    %561 = vmatprep.subr.mxu0 0.0
    %562 = vmatpush1.msra.mxu0 0.0
    %563 = vmatprep.subr.mxu0 0.0
    %564 = vmatpush1.msra.mxu0 0.0
    %565 = vmatprep.subr.mxu0 0.0
    %566 = vmatpush1.msra.mxu0 0.0
    %567 = vmatprep.mubr.f32.mxu0 0.0
    %v568 = vand.u32 %v31, 4294901760
    %569 = vmatmul.mubr.f32.gmra.mrb[0].mxu0 %v568
    %v570 = vpop.f32.mrb[0].mxu0
    %v571 = vadd.f32 %v492, %v570
    %v572 = vpop.f32.mrb[0].mxu0
    %573 = vdwg.mxu0
    %vm574 = vcmask 261120
    %575 = vst.msk [vmem:[#allocation2] sm:$0xff] %vm574, %v571
    // Predicated region
    $region10: #{tpu_custom_call.1} parent=1 // pred_check
      _
    $region11: #{tpu_custom_call.1} parent=1 // pred_check_branch
      %577 = sbr.rel (0) target = $region13
    $region12: #{tpu_custom_call.1} parent=1 // pred_region
      %s579 = ssub.s32 128, 128
      %580 = vsyncadd [#allocation3], %s579
      %s582 = sshll.u32 [#allocation2], 4
      %s583 = int_to_ptr.vmem [resolvable:$true] %s582
      %585 = dma.vmem_to_hbm [thread:$0]  %s583, 128, %s2, [#allocation3]
    $region13: #{tpu_custom_call.1} parent=1 // pred_fallthru
      _
    // Predicated region
    $region14: #{tpu_custom_call.1} parent=1 // pred_check
      _
    $region15: #{tpu_custom_call.1} parent=1 // pred_check_branch
      %587 = sbr.rel (0) target = $region17
    $region16: #{tpu_custom_call.1} parent=1 // pred_region
      %588 = dma.done [#allocation3], 128
    $region17: #{tpu_custom_call.1} parent=1 // pred_fallthru
      _
    %589 = vsyncpa [#allocation3], 1

</llo_original>
